<compile_context>
chip_gen: v7x
topology: tpu7x:2x2x1
jax: 0.10.0
libtpu: 0.0.40
codegen_flags: <defaults>
</compile_context>

<pallas_src>
import functools

import jax
import jax.numpy as jnp
from jax import lax
from jax.experimental import pallas as pl
from jax.experimental.pallas import tpu as pltpu


def _lossferatu_kernel(logits_ref, labels_ref, out_ref, acc_ref, *, n_rows, tile_rows):
    i = pl.program_id(0)

    # Running-sum accumulator (SMEM scratch) persists across the sequential
    # ("arbitrary") batch-tile grid; it is not zero-initialized.
    @pl.when(i == 0)
    def _init():
        acc_ref[0] = jnp.float32(0.0)

    # HBM->VMEM DMA stays in the input dtype (e.g. bf16); math is f32.
    logits = logits_ref[...].astype(jnp.float32)              # (TN, C)
    labels = labels_ref[...]                                   # (TN, 1) int32

    # Numerically-stable cross-entropy without materializing log_softmax,
    # one-hot, or their product:
    #   loss_r = log(sum_c exp(x_rc - m_r)) - (x_r[label_r] - m_r)
    m = jnp.max(logits, axis=1, keepdims=True)                 # (TN, 1)
    shifted = logits - m                                       # (TN, C)
    denom = jnp.sum(jnp.exp(shifted), axis=1, keepdims=True)   # (TN, 1)

    classes = lax.broadcasted_iota(jnp.int32, shifted.shape, 1)
    target = jnp.sum(jnp.where(classes == labels, shifted, 0.0),
                     axis=1, keepdims=True)                    # (TN, 1)

    sample_loss = jnp.log(denom) - target                      # (TN, 1)

    # Mask padded rows of a ragged last tile (their contents are unspecified).
    row_ids = i * tile_rows + lax.broadcasted_iota(jnp.int32, sample_loss.shape, 0)
    sample_loss = jnp.where(row_ids < n_rows, sample_loss, 0.0)

    acc_ref[0] += jnp.sum(sample_loss)

    @pl.when(i == pl.num_programs(0) - 1)
    def _finalize():
        out_ref[0, 0] = acc_ref[0] / jnp.float32(n_rows)


def _choose_tile_rows(n, c, itemsize):
    # Aim for ~2 MiB of logits per tile (BlockSpec double-buffers it), which
    # stays well under the scoped-VMEM defaults and v7x's 64 MiB physical.
    target_bytes = 2 * 1024 * 1024
    rows = max(1, target_bytes // max(1, c * itemsize))
    if rows >= n:
        return n  # single full-batch tile: full-dim block is always legal
    # Round to the native sublane packing of the input dtype
    # (8 rows for 4-byte, 16 for 2-byte, 32 for 1-byte elements).
    sub = max(8, 32 // max(1, itemsize))
    rows = max(sub, (rows // sub) * sub)
    return min(rows, n)


def lossferatu_loss(output, labels, training_progress=0.0, tile_rows=None):
    """LossferatuLoss(classification=True, loss_str=None) forward.

    output: (N, C) float logits (f32 or bf16; DMA'd as-is, math in f32).
    labels: (N,) integer class ids.
    Returns the scalar mean cross-entropy over the batch (float32).
    """
    del training_progress  # TODO(synk): eval(self.loss_str) custom-loss path has no static Pallas equivalent
    n, c = output.shape
    itemsize = jnp.dtype(output.dtype).itemsize
    if tile_rows is None:
        tile_rows = _choose_tile_rows(n, c, itemsize)
    num_tiles = pl.cdiv(n, tile_rows)

    labels2d = labels.reshape(n, 1).astype(jnp.int32)

    # VMEM budget: double-buffered logits tile (input dtype) + lane-padded
    # int32 label tile + f32 temporaries, with headroom; capped for v7x.
    logits_tile_bytes = tile_rows * c * itemsize
    labels_tile_bytes = tile_rows * 128 * 4
    vmem_limit = int(min(64 * 1024 * 1024,
                         max(8 * 1024 * 1024,
                             6 * logits_tile_bytes
                             + 4 * labels_tile_bytes
                             + 2 * 1024 * 1024)))

    kernel = functools.partial(_lossferatu_kernel, n_rows=n, tile_rows=tile_rows)

    loss = pl.pallas_call(
        kernel,
        out_shape=jax.ShapeDtypeStruct((1, 1), jnp.float32),
        grid=(num_tiles,),
        in_specs=[
            pl.BlockSpec((tile_rows, c), lambda i: (i, 0)),
            pl.BlockSpec((tile_rows, 1), lambda i: (i, 0)),
        ],
        out_specs=pl.BlockSpec(memory_space=pltpu.SMEM),
        scratch_shapes=[pltpu.SMEM((1,), jnp.float32)],
        compiler_params=pltpu.CompilerParams(
            # Scalar accumulation across batch tiles => sequential axis.
            dimension_semantics=("arbitrary",),
            vmem_limit_bytes=vmem_limit,
        ),
    )(output, labels2d)
    return loss[0, 0]


def _reference(output, labels):
    logp = jax.nn.log_softmax(output.astype(jnp.float32), axis=1)
    onehot = jax.nn.one_hot(labels, output.shape[1], dtype=jnp.float32)
    return jnp.mean(-jnp.sum(onehot * logp, axis=1))


if __name__ == "__main__":
    key = jax.random.PRNGKey(0)
    k1, k2 = jax.random.split(key)

    # Small shapes: ragged batch (20 rows over 16-row tiles) and a class dim
    # that is not a lane multiple, exercising the masking paths; bf16 logits
    # exercise the narrow-dtype DMA path.
    N, C = 20, 40
    logits = jax.random.normal(k1, (N, C), dtype=jnp.float32).astype(jnp.bfloat16)
    labels = jax.random.randint(k2, (N,), 0, C, dtype=jnp.int32)
    training_progress = 0.5

    loss = lossferatu_loss(logits, labels, training_progress, tile_rows=16)
    loss = jax.block_until_ready(loss)

    ref = _reference(logits, labels)
    assert jnp.allclose(loss, ref, rtol=1e-5, atol=1e-5), (loss, ref)
    print("KERNEL_OK")
</pallas_src>

<mosaic_0001>
module attributes {stable_mosaic.version = 11 : i64} {
  func.func @_lossferatu_kernel(%arg0: i32, %arg1: memref<16x40xbf16, #tpu.memory_space<vmem>>, %arg2: memref<16x1xi32, #tpu.memory_space<vmem>>, %arg3: memref<1x1xf32, #tpu.memory_space<smem>>, %arg4: memref<1xf32, #tpu.memory_space<smem>>) attributes {dimension_semantics = [#tpu.dimension_semantics<arbitrary>], iteration_bounds = array<i64: 2>, scalar_prefetch = 0 : i64, scratch_operands = 1 : i64, tpu.core_type = #tpu.core_type<tc>, window_params = [{transform_indices = @transform_0, window_bounds = array<i64: 16, 40>}, {transform_indices = @transform_1, window_bounds = array<i64: 16, 1>}, {transform_indices = @transform_2, window_bounds = array<i64: 1, 1>}]} {
    %c0_i32 = arith.constant 0 : i32
    %0 = arith.cmpi eq, %arg0, %c0_i32 : i32
    %1 = arith.extui %0 : i1 to i32
    %c0_i32_0 = arith.constant 0 : i32
    %2 = arith.cmpi ne, %1, %c0_i32_0 : i32
    scf.if %2 {
      %cst_12 = arith.constant 0.000000e+00 : f32
      %c0_13 = arith.constant 0 : index
      %40 = memref.load %arg4[%c0_13] : memref<1xf32, #tpu.memory_space<smem>>
      memref.store %cst_12, %arg4[%c0_13] : memref<1xf32, #tpu.memory_space<smem>>
    } else {
    }
    %c0 = arith.constant 0 : index
    %c0_1 = arith.constant 0 : index
    %3 = vector.load %arg1[%c0, %c0_1] : memref<16x40xbf16, #tpu.memory_space<vmem>>, vector<16x40xbf16>
    %4 = arith.extf %3 : vector<16x40xbf16> to vector<16x40xf32>
    %c0_2 = arith.constant 0 : index
    %c0_3 = arith.constant 0 : index
    %5 = vector.load %arg2[%c0_2, %c0_3] : memref<16x1xi32, #tpu.memory_space<vmem>>, vector<16x1xi32>
    %cst = arith.constant dense<0xFF800000> : vector<16xf32>
    %6 = vector.multi_reduction <maximumf>, %4, %cst [1] : vector<16x40xf32> to vector<16xf32>
    %7 = vector.shape_cast %6 : vector<16xf32> to vector<16x1xf32>
    %8 = vector.broadcast %7 : vector<16x1xf32> to vector<16x40xf32>
    %9 = arith.subf %4, %8 : vector<16x40xf32>
    %10 = math.exp %9 : vector<16x40xf32>
    %cst_4 = arith.constant dense<0.000000e+00> : vector<16xf32>
    %11 = vector.multi_reduction <add>, %10, %cst_4 [1] : vector<16x40xf32> to vector<16xf32>
    %12 = vector.shape_cast %11 : vector<16xf32> to vector<16x1xf32>
    %13 = tpu.iota {dimensions = array<i32: 1>} : vector<16x40xi32>
    %14 = vector.broadcast %5 : vector<16x1xi32> to vector<16x40xi32>
    %15 = arith.cmpi eq, %13, %14 : vector<16x40xi32>
    %cst_5 = arith.constant 0.000000e+00 : f32
    %16 = vector.broadcast %cst_5 : f32 to vector<16x40xf32>
    %17 = arith.select %15, %9, %16 : vector<16x40xi1>, vector<16x40xf32>
    %cst_6 = arith.constant dense<0.000000e+00> : vector<16xf32>
    %18 = vector.multi_reduction <add>, %17, %cst_6 [1] : vector<16x40xf32> to vector<16xf32>
    %19 = vector.shape_cast %18 : vector<16xf32> to vector<16x1xf32>
    %20 = math.log %12 : vector<16x1xf32>
    %21 = arith.subf %20, %19 : vector<16x1xf32>
    %c16_i32 = arith.constant 16 : i32
    %22 = arith.muli %arg0, %c16_i32 : i32
    %23 = tpu.iota {dimensions = array<i32: 0>} : vector<16x1xi32>
    %24 = vector.broadcast %22 : i32 to vector<16x1xi32>
    %25 = arith.addi %24, %23 : vector<16x1xi32>
    %c20_i32 = arith.constant 20 : i32
    %26 = vector.broadcast %c20_i32 : i32 to vector<16x1xi32>
    %27 = arith.cmpi slt, %25, %26 : vector<16x1xi32>
    %cst_7 = arith.constant 0.000000e+00 : f32
    %28 = vector.broadcast %cst_7 : f32 to vector<16x1xf32>
    %29 = arith.select %27, %21, %28 : vector<16x1xi1>, vector<16x1xf32>
    %c0_8 = arith.constant 0 : index
    %30 = memref.load %arg4[%c0_8] : memref<1xf32, #tpu.memory_space<smem>>
    %31 = vector.shape_cast %29 : vector<16x1xf32> to vector<1x16x1xf32>
    %cst_9 = arith.constant dense<0.000000e+00> : vector<1xf32>
    %32 = vector.multi_reduction <add>, %31, %cst_9 [1, 2] : vector<1x16x1xf32> to vector<1xf32>
    %33 = vector.shape_cast %32 : vector<1xf32> to vector<1x1x1xf32>
    %34 = vector.extract %33[0, 0, 0] : f32 from vector<1x1x1xf32>
    %35 = arith.addf %30, %34 : f32
    %c0_10 = arith.constant 0 : index
    %36 = memref.load %arg4[%c0_10] : memref<1xf32, #tpu.memory_space<smem>>
    memref.store %35, %arg4[%c0_10] : memref<1xf32, #tpu.memory_space<smem>>
    %c1_i32 = arith.constant 1 : i32
    %37 = arith.cmpi eq, %arg0, %c1_i32 : i32
    %38 = arith.extui %37 : i1 to i32
    %c0_i32_11 = arith.constant 0 : i32
    %39 = arith.cmpi ne, %38, %c0_i32_11 : i32
    scf.if %39 {
      %c0_12 = arith.constant 0 : index
      %40 = memref.load %arg4[%c0_12] : memref<1xf32, #tpu.memory_space<smem>>
      %cst_13 = arith.constant 2.000000e+01 : f32
      %41 = arith.divf %40, %cst_13 : f32
      %c0_14 = arith.constant 0 : index
      %c0_15 = arith.constant 0 : index
      %42 = memref.load %arg3[%c0_14, %c0_15] : memref<1x1xf32, #tpu.memory_space<smem>>
      memref.store %41, %arg3[%c0_14, %c0_15] : memref<1x1xf32, #tpu.memory_space<smem>>
    } else {
    }
    return
  }
  func.func @transform_0(%arg0: i32) -> (i32, i32) {
    %c0_i32 = arith.constant 0 : i32
    %c0_i32_0 = arith.constant 0 : i32
    return %arg0, %c0_i32 : i32, i32
  }
  func.func @transform_1(%arg0: i32) -> (i32, i32) {
    %c0_i32 = arith.constant 0 : i32
    %c0_i32_0 = arith.constant 0 : i32
    return %arg0, %c0_i32 : i32, i32
  }
  func.func @transform_2(%arg0: i32) -> (i32, i32) {
    %c0_i32 = arith.constant 0 : i32
    %c0_i32_0 = arith.constant 0 : i32
    %c0_i32_1 = arith.constant 0 : i32
    return %c0_i32, %c0_i32_0 : i32, i32
  }
}

</mosaic_0001>

<llo_original>
// kernel: tpu_custom_call.1
$region0: #{tpu_custom_call.1}
  #allocation0 [shape = 'u32[]', space=smem, size = 0x4, offset = 0x4, fixed_abs, tag = 'smem constant byte address 0x4 - core index']
  #allocation1 [shape = 'u32[144,128]{1,0:T(1,128)}', space=vmem, size = 0x12000, scoped, tag = 'internal scratch']
  #allocation2 [shape = 'f32[1]{0:T(128)}', space=smem, size = 0x200, scoped, tag = 'scratch operand']
  %s0 = inlined_call_operand.vmem [shape: bf16[20,40], index: 0, kind: input, shape index: {}]
  %s1 = inlined_call_operand.vmem [shape: s32[20,1], index: 1, kind: input, shape index: {}]
  %s2 = inlined_call_operand.hbm [shape: f32[1,1], index: 2, kind: output, shape index: {}]
  %s3 = sld [smem:[#allocation0]]
  $region49: #{tpu_custom_call.1} parent=0
    _
  %s5 = ssub.s32 1, %s3
  %s6 = scalar_select 0, %s5, %s3
  $region1: #{tpu_custom_call.1} parent=0
    #allocation3 [shape = 'u8[512]{0}', space=smem, size = 0x200, scoped, tag = 'output window, operand 0, single buffered']
    #allocation4 [shape = 's32[2]{0}', space=sflag, size = 0x8, scoped, tag = 'scoped memory for tpu_custom_call.1']
    %7 = vsyncpa [#allocation4], 0
    loop: start=0, step=1, limit=4
    $region2: #{tpu_custom_call.1} parent=1 // loop_pre_header
      _
    $region3: #{tpu_custom_call.1} parent=1 // loop_header
      %s9 = sphi 0, %s13
      %p10 = scmp.ge.s32.totalorder %s9, 4
      %s19 = sphi 0, %s21
      %s22 = sphi 0, %s19
      %s23 = sphi 0, %s22
      %s39 = sphi 0, %s23
      %s45 = sphi 0, %s47
      %s48 = sphi 0, %s45
      %s49 = sphi 0, %s48
      %s65 = sphi 0, %s49
      %s69 = sphi 0, %s69
      %s71 = sphi 0, %s69
      %s72 = sphi 0, %s71
      %s86 = sphi 0, %s72
    $region4: #{tpu_custom_call.1} parent=1 // loop_header_branch
      %12 = sbr.rel (%p10) target = $region8
    $region5: #{tpu_custom_call.1} parent=1 // loop_body
      %s14 = ssub.s32 %s9, 1
      %s15 = ssub.s32 %s9, 2
      %s16 = sadd.s32 %s9, 1
      %s17 = ssub.s32 %s9, %s16
      %p18 = scmp.eq.s32.totalorder %s17, 0
      %s20 = sadd.s32 %s19, 1
      %s21 = scalar_select %p18, %s19, %s20
      %p24 = pneg %p18
      %p25 = scmp.eq.s32.totalorder %s9, 1
      %p26 = por %p24, %p25
      %p27 = scmp.ne.s32.totalorder %s19, %s22
      %p28 = scmp.eq.s32.totalorder %s9, 0
      %p29 = por %p27, %p28
      %p30 = scmp.ne.s32.totalorder %s19, %s22
      %p31 = scmp.eq.s32.totalorder %s14, 1
      %p32 = por %p30, %p31
      %p33 = scmp.ne.s32.totalorder %s22, %s23
      %p34 = scmp.eq.s32.totalorder %s14, 0
      %p35 = por %p33, %p34
      %p36 = scmp.ne.s32.totalorder %s22, %s23
      %p37 = scmp.eq.s32.totalorder %s15, 1
      %p38 = por %p36, %p37
      %p40 = scmp.ne.s32.totalorder %s23, %s39
      %p41 = scmp.eq.s32.totalorder %s15, 0
      %p42 = por %p40, %p41
      %s43 = ssub.s32 %s9, %s16
      %p44 = scmp.eq.s32.totalorder %s43, 0
      %s46 = sadd.s32 %s45, 1
      %s47 = scalar_select %p44, %s45, %s46
      %p50 = pneg %p44
      %p51 = scmp.eq.s32.totalorder %s9, 1
      %p52 = por %p50, %p51
      %p53 = scmp.ne.s32.totalorder %s45, %s48
      %p54 = scmp.eq.s32.totalorder %s9, 0
      %p55 = por %p53, %p54
      %p56 = scmp.ne.s32.totalorder %s45, %s48
      %p57 = scmp.eq.s32.totalorder %s14, 1
      %p58 = por %p56, %p57
      %p59 = scmp.ne.s32.totalorder %s48, %s49
      %p60 = scmp.eq.s32.totalorder %s14, 0
      %p61 = por %p59, %p60
      %p62 = scmp.ne.s32.totalorder %s48, %s49
      %p63 = scmp.eq.s32.totalorder %s15, 1
      %p64 = por %p62, %p63
      %p66 = scmp.ne.s32.totalorder %s49, %s65
      %p67 = scmp.eq.s32.totalorder %s15, 0
      %p68 = por %p66, %p67
      %s70 = sadd.s32 %s69, 1
      %p73 = scmp.eq.s32.totalorder %s9, 1
      %p74 = scmp.ne.s32.totalorder %s69, %s71
      %p75 = scmp.eq.s32.totalorder %s9, 0
      %p76 = por %p74, %p75
      %p77 = scmp.ne.s32.totalorder %s69, %s71
      %p78 = scmp.eq.s32.totalorder %s14, 1
      %p79 = por %p77, %p78
      %p80 = scmp.ne.s32.totalorder %s71, %s72
      %p81 = scmp.eq.s32.totalorder %s14, 0
      %p82 = por %p80, %p81
      %p83 = scmp.ne.s32.totalorder %s71, %s72
      %p84 = scmp.eq.s32.totalorder %s15, 1
      %p85 = por %p83, %p84
      %p87 = scmp.ne.s32.totalorder %s72, %s86
      %p88 = scmp.eq.s32.totalorder %s15, 0
      %p89 = por %p87, %p88
      %p90 = scmp.le.s32.totalorder 1, %s9
      %p91 = scmp.lt.s32.totalorder %s9, 3
      %p92 = pnand %p90, %p91
      %p93 = pneg %p92
      // Predicated region
      $region9: #{tpu_custom_call.1} parent=5 // pred_check
        _
      $region10: #{tpu_custom_call.1} parent=5 // pred_check_branch
        %95 = sbr.rel (%p92) target = $region12
      $region11: #{tpu_custom_call.1} parent=5 // pred_region
        %s96 = ssub.s32 %s9, 1
      $region12: #{tpu_custom_call.1} parent=5 // pred_fallthru
        _
      %p97 = scmp.lt.s32.totalorder %s9, 2
      // Predicated region
      $region13: #{tpu_custom_call.1} parent=5 // pred_check
        %p98 = pneg %p97
      $region14: #{tpu_custom_call.1} parent=5 // pred_check_branch
        %100 = sbr.rel (%p98) target = $region16
      $region15: #{tpu_custom_call.1} parent=5 // pred_region
        // Predicated region
        $region17: #{tpu_custom_call.1} parent=15 // pred_check
          %p101 = pneg %p29
        $region18: #{tpu_custom_call.1} parent=15 // pred_check_branch
          %103 = sbr.rel (%p101) target = $region20
        $region19: #{tpu_custom_call.1} parent=15 // pred_region
          %s104 = smul.u32 2, %s9
          %s105 = ssub.s32 3, %s104
          %p106 = scmp.lt.s32.totalorder %s105, 2
          %s107 = scalar_select %p106, %s105, 2
          %s108 = smul.u32 64, %s107
          %p109 = scmp.lt.s32.totalorder %s104, 2
          %s110 = scalar_select %p109, %s104, 2
          %s111 = smul.addr %s110, 4
          %s112 = scalar_lea.vmem %s0, %s111
          %s113 = smul.u32 2, %s9
          %s114 = ssub.s32 3, %s113
          %p115 = scmp.lt.s32.totalorder %s114, 2
          %s116 = scalar_select %p115, %s114, 2
          %s117 = smul.u32 64, %s116
        $region20: #{tpu_custom_call.1} parent=15 // pred_fallthru
          _
        // Predicated region
        $region21: #{tpu_custom_call.1} parent=15 // pred_check
          %p118 = pneg %p55
        $region22: #{tpu_custom_call.1} parent=15 // pred_check_branch
          %120 = sbr.rel (%p118) target = $region24
        $region23: #{tpu_custom_call.1} parent=15 // pred_region
          %s121 = smul.u32 2, %s9
          %s122 = ssub.s32 3, %s121
          %p123 = scmp.lt.s32.totalorder %s122, 2
          %s124 = scalar_select %p123, %s122, 2
          %s125 = smul.u32 128, %s124
          %p126 = scmp.lt.s32.totalorder %s121, 2
          %s127 = scalar_select %p126, %s121, 2
          %s128 = smul.addr %s127, 8
          %s129 = scalar_lea.vmem %s1, %s128
          %s130 = smul.u32 2, %s9
          %s131 = ssub.s32 3, %s130
          %p132 = scmp.lt.s32.totalorder %s131, 2
          %s133 = scalar_select %p132, %s131, 2
          %s134 = smul.u32 128, %s133
        $region24: #{tpu_custom_call.1} parent=15 // pred_fallthru
          _
      $region16: #{tpu_custom_call.1} parent=5 // pred_fallthru
        _
      %p135 = scmp.le.s32.totalorder 1, %s9
      %p136 = scmp.lt.s32.totalorder %s9, 3
      %p137 = pnand %p135, %p136
      %p138 = pneg %p137
      // Predicated region
      $region25: #{tpu_custom_call.1} parent=5 // pred_check
        _
      $region26: #{tpu_custom_call.1} parent=5 // pred_check_branch
        %140 = sbr.rel (%p137) target = $region28
      $region27: #{tpu_custom_call.1} parent=5 // pred_region
        %s141 = ssub.s32 %s9, 1
        %s142 = smul.u32 2, %s14
        %s143 = ssub.s32 3, %s142
        %p144 = scmp.lt.s32.totalorder %s143, 2
        %s145 = scalar_select %p144, %s143, 2
        %s146 = smul.u32 64, %s145
        %p147 = scmp.lt.s32.totalorder %s142, 2
        %s148 = scalar_select %p147, %s142, 2
        %s149 = smul.addr %s148, 4
        %s150 = scalar_lea.vmem %s0, %s149
        %p151 = pneg %p35
        %p152 = pneg %p32
        %s153 = smul.u32 2, %s14
        %s154 = ssub.s32 3, %s153
        %p155 = scmp.lt.s32.totalorder %s154, 2
        %s156 = scalar_select %p155, %s154, 2
        %s157 = smul.u32 128, %s156
        %p158 = scmp.lt.s32.totalorder %s153, 2
        %s159 = scalar_select %p158, %s153, 2
        %s160 = smul.addr %s159, 8
        %s161 = scalar_lea.vmem %s1, %s160
        %p162 = pneg %p61
        %p163 = pneg %p58
        %p164 = pneg %p82
        %p165 = pneg %p79
        %s166 = smul.u32 2, %s14
        %s167 = ssub.s32 3, %s166
        %p168 = scmp.lt.s32.totalorder %s167, 2
        %s169 = scalar_select %p168, %s167, 2
        %s170 = smul.u32 64, %s169
        %p171 = scmp.lt.s32.totalorder %s166, 2
        %s172 = scalar_select %p171, %s166, 2
        %s173 = smul.addr %s172, 4
        %s174 = scalar_lea.vmem %s0, %s173
        %s175 = smul.u32 2, %s14
        %s176 = ssub.s32 3, %s175
        %p177 = scmp.lt.s32.totalorder %s176, 2
        %s178 = scalar_select %p177, %s176, 2
        %s179 = smul.u32 64, %s178
        %s180 = smul.u32 2, %s14
        %s181 = ssub.s32 3, %s180
        %p182 = scmp.lt.s32.totalorder %s181, 2
        %s183 = scalar_select %p182, %s181, 2
        %s184 = smul.u32 128, %s183
        %p185 = scmp.lt.s32.totalorder %s180, 2
        %s186 = scalar_select %p185, %s180, 2
        %s187 = smul.addr %s186, 8
        %s188 = scalar_lea.vmem %s1, %s187
        %s189 = smul.u32 2, %s14
        %s190 = ssub.s32 3, %s189
        %p191 = scmp.lt.s32.totalorder %s190, 2
        %s192 = scalar_select %p191, %s190, 2
        %s193 = smul.u32 128, %s192
        %p194 = scmp.eq.s32.totalorder %s14, 0
        // Predicated region
        $region29: #{tpu_custom_call.1} parent=27 // pred_check
          %p195 = pneg %p194
        $region30: #{tpu_custom_call.1} parent=27 // pred_check_branch
          %197 = sbr.rel (%p195) target = $region32
        $region31: #{tpu_custom_call.1} parent=27 // pred_region
          %s198 = scalar_lea.smem [#allocation2], 0
          %199 = sst [smem:[%s198]] 0.0
        $region32: #{tpu_custom_call.1} parent=27 // pred_fallthru
          _
        %v200 = vld [vmem:[%s174] sm:$0xf]
        %v201 = vld [vmem:[%s174 + $0x4] sm:$0xf]
        %v202 = vunpack.c.l.bf16 %v200
        %v203 = vunpack.c.l.bf16 %v201
        %v204 = vld [vmem:[%s188] sm:$0xff]
        %v205 = vld [vmem:[%s188 + $0x8] sm:$0xff]
        %vm206 = vcmask 326656
        %v207 = vsel %vm206, %v202, -inf
        %208 = vmax.xlane.f32.xlu0 %v207
        %v209 = vpop.xlane.xlu0 %208
        %v210 = vsel %vm206, %v203, -inf
        %211 = vmax.xlane.f32.xlu0 %v210
        %v212 = vpop.xlane.xlu0 %211
        %v213 = vsub.f32 %v202, %v209
        %v214 = vsub.f32 %v203, %v212
        %v215 = vmul.f32 %v213, 1.442695
        %v216 = vpow.pop %v215
        %v217 = vmul.f32 %v214, 1.442695
        %v218 = vpow.pop %v217
        %v219 = vsel %vm206, %v216, 0.0
        %220 = vadd.xlane.f32.xlu0 %v219
        %v221 = vpop.xlane.xlu0 %220
        %v222 = vsel %vm206, %v218, 0.0
        %223 = vadd.xlane.f32.xlu0 %v222
        %v224 = vpop.xlane.xlu0 %223
        %v225 = vlaneseq
        %v226 = vand.u32 %v225, 127
        %227 = vset.pattern.permute.xlu0 0
        %228 = vperm.xlu0 %227, %v204
        %v229 = vpop.permute.xlu0 %228
        %230 = vset.pattern.permute.xlu0 0
        %231 = vperm.xlu0 %230, %v205
        %v232 = vpop.permute.xlu0 %231
        %vm233 = vcmp.eq.s32.totalorder %v226, %v229
        %vm234 = vcmp.eq.s32.totalorder %v226, %v232
        %v235 = vsel %vm233, %v213, 0.0
        %v236 = vsel %vm234, %v214, 0.0
        %v237 = vsel %vm206, %v235, 0.0
        %238 = vadd.xlane.f32.xlu0 %v237
        %v239 = vpop.xlane.xlu0 %238
        %v240 = vsel %vm206, %v236, 0.0
        %241 = vadd.xlane.f32.xlu0 %v240
        %v242 = vpop.xlane.xlu0 %241
        %v243 = vlog2.pop %v221
        %v244 = vmul.f32 %v243, 0.6931472
        %v245 = vlog2.pop %v224
        %v246 = vmul.f32 %v245, 0.6931472
        %v247 = vsub.f32 %v244, %v239
        %v248 = vsub.f32 %v246, %v242
        %s249 = smul.u32 %s14, 16
        %v250 = vlaneseq
        %v251 = vshrl.u32 %v250, 7
        %v252 = vadd.s32 %v251, 8
        %v253 = vstv %s249
        %v254 = vadd.s32 %v253, %v251
        %v255 = vadd.s32 %v253, %v252
        %vm256 = vcmp.lt.s32.totalorder %v254, 20
        %vm257 = vcmp.lt.s32.totalorder %v255, 20
        %v258 = vsel %vm256, %v247, 0.0
        %v259 = vsel %vm257, %v248, 0.0
        %s260 = sld [smem:[#allocation2]]
        %vm261 = vcmask 7168
        %v262 = vsel %vm261, %v258, 0.0
        %v263 = vsel %vm261, %v259, 0.0
        %v264 = vadd.f32 %v262, %v263
        %265 = vadd.xlane.f32.xlu0 %v264
        %v266 = vpop.xlane.xlu0 %265
        %v267 = vrot.slane %v266, 4
        %v268 = vadd.f32 %v266, %v267
        %v269 = vrot.slane %v268, 2
        %v270 = vadd.f32 %v268, %v269
        %v271 = vrot.slane %v270, 1
        %v272 = vadd.f32 %v270, %v271
        %s273 = vtos %v272
        %s274 = sadd.f32 %s260, %s273
        %s275 = scalar_lea.smem [#allocation2], 0
        %276 = sst [smem:[%s275]] %s274
        %p277 = scmp.eq.s32.totalorder %s14, 1
        // Predicated region
        $region33: #{tpu_custom_call.1} parent=27 // pred_check
          %p278 = pneg %p277
        $region34: #{tpu_custom_call.1} parent=27 // pred_check_branch
          %280 = sbr.rel (%p278) target = $region36
        $region35: #{tpu_custom_call.1} parent=27 // pred_region
          %s281 = sld [smem:[#allocation2]]
          %v282 = vrcp.pop 20.0
          %s283 = vtos %v282
          %s284 = smul.f32 %s281, %s283
          %s285 = scalar_lea.smem [#allocation3], 0
          %286 = sst [smem:[%s285]] %s284
        $region36: #{tpu_custom_call.1} parent=27 // pred_fallthru
          _
        // Predicated region
        $region37: #{tpu_custom_call.1} parent=27 // pred_check
          %p287 = pneg %p79
        $region38: #{tpu_custom_call.1} parent=27 // pred_check_branch
          %289 = sbr.rel (%p287) target = $region40
        $region39: #{tpu_custom_call.1} parent=27 // pred_region
          %s291 = ssub.s32 16, 16
          %292 = vsyncadd [#allocation4], %s291
          %295 = dma.smem_to_hbm [#allocation3], 16, %s2, [#allocation4]
        $region40: #{tpu_custom_call.1} parent=27 // pred_fallthru
          _
        // Predicated region
        $region41: #{tpu_custom_call.1} parent=27 // pred_check
          %p296 = pneg %p79
        $region42: #{tpu_custom_call.1} parent=27 // pred_check_branch
          %298 = sbr.rel (%p296) target = $region44
        $region43: #{tpu_custom_call.1} parent=27 // pred_region
          %299 = dma.done [#allocation4], 16
        $region44: #{tpu_custom_call.1} parent=27 // pred_fallthru
          _
        %300 = sfence
      $region28: #{tpu_custom_call.1} parent=5 // pred_fallthru
        _
      %p301 = scmp.le.s32.totalorder 2, %s9
      // Predicated region
      $region45: #{tpu_custom_call.1} parent=5 // pred_check
        %p302 = pneg %p301
      $region46: #{tpu_custom_call.1} parent=5 // pred_check_branch
        %304 = sbr.rel (%p302) target = $region48
      $region47: #{tpu_custom_call.1} parent=5 // pred_region
        %s305 = ssub.s32 %s9, 2
      $region48: #{tpu_custom_call.1} parent=5 // pred_fallthru
        _
    $region6: #{tpu_custom_call.1} parent=1 // loop_footer
      %s13 = sadd.s32 1, %s9
    $region7: #{tpu_custom_call.1} parent=1 // loop_footer_branch
      %8 = sbr.rel target = $region3
    $region8: #{tpu_custom_call.1} parent=1 // loop_exit
      _
    %306 = vsyncpa [#allocation4], 1
    %s307 = scalar_lea.sflag [#allocation4], 1
    %308 = vsyncpa %s307, 1

</llo_original>
